<compile_context>
chip_gen: v7x
topology: tpu7x:2x2x1
jax: 0.10.0
libtpu: 0.0.40
codegen_flags: <defaults>
</compile_context>

<pallas_src>
import jax
import jax.numpy as jnp
from jax.experimental import pallas as pl
from jax.experimental.pallas import tpu as pltpu


def _round_up(x, m):
    return ((x + m - 1) // m) * m


def _maritime_mlm_kernel(hidden_ref, w_ref, b_ref, labels_ref, weight_ref,
                         logits_ref, part_ref,
                         m_sc, l_sc, p_sc):
    v_idx = pl.program_id(1)
    nv = pl.num_programs(1)
    bm = hidden_ref.shape[0]
    bv = w_ref.shape[1]

    # ---- init online-softmax state for this BS tile ----
    @pl.when(v_idx == 0)
    def _():
        m_sc[...] = jnp.full_like(m_sc, -jnp.inf)
        l_sc[...] = jnp.zeros_like(l_sc)
        p_sc[...] = jnp.zeros_like(p_sc)

    # ---- LM head for this (BS tile, V tile): bf16 MXU, f32 accumulate ----
    logits = jnp.dot(hidden_ref[...], w_ref[...],
                     preferred_element_type=jnp.float32)
    logits = logits + b_ref[...].astype(jnp.float32)          # (bm, bv) f32
    logits_ref[...] = logits.astype(logits_ref.dtype)

    # ---- online softmax update (one pass over the V tile) ----
    tile_max = jnp.max(logits, axis=-1, keepdims=True)         # (bm, 1)
    m_new = jnp.maximum(m_sc[...], tile_max)
    alpha = jnp.exp(m_sc[...] - m_new)
    l_sc[...] = alpha * l_sc[...] + jnp.sum(jnp.exp(logits - m_new),
                                            axis=-1, keepdims=True)
    m_sc[...] = m_new

    # ---- tile-aware label-logit pick (labels already shifted; -100 and
    #      padded lanes never hit) ----
    rel = labels_ref[...] - v_idx * bv                          # (bm, 1) int32
    lane = jax.lax.broadcasted_iota(jnp.int32, (bm, bv), 1)
    hit = lane == rel
    p_sc[...] += jnp.sum(jnp.where(hit, logits, 0.0), axis=-1, keepdims=True)

    # ---- finalize: weighted NLL partials for this BS tile ----
    @pl.when(v_idx == nv - 1)
    def _():
        nll = m_sc[...] + jnp.log(l_sc[...]) - p_sc[...]        # (bm, 1)
        valid = (labels_ref[...] != -100).astype(jnp.float32)   # (bm, 1)
        weighted = nll * valid * weight_ref[...]
        wsum = jnp.sum(weighted)
        cnt = jnp.sum(valid)
        # one aligned (1, 8, 128) slab; lane 0 = weighted sum, lane 1 = count
        lane3 = jax.lax.broadcasted_iota(jnp.int32, part_ref.shape, 2)
        part_ref[...] = jnp.where(lane3 == 0, wsum,
                                  jnp.where(lane3 == 1, cnt, 0.0))


def maritime_mlm_forward(hidden, lm_w, lm_b, labels,
                         quality_scores, maritime_scores,
                         *, bm=512, bv=1024,
                         logits_dtype=jnp.float32,
                         core_parallel=False,
                         w_buffer_count=2,
                         vmem_limit_bytes=None):
    """Returns (logits[B,S,V], loss scalar f32) — the module's
    outputs.logits / outputs.loss.

    Generation tuning:
      * v5e:  bm/bv multiples of 128 suffice; up to bm=1024, bv=2048 (VMEM
              limit is raised automatically above the 16 MiB scoped default).
      * v6e:  keep bm/bv multiples of 256; bm=1024, bv=2048 fits comfortably.
      * v7x:  keep the working set under ~64 MiB (e.g. bm=512, bv=2048 or
              bm=1024, bv=1024) and pass core_parallel=True to shard the BS
              grid axis across both TensorCores.
      * logits_dtype=jnp.bfloat16 halves the dominant HBM writeback (the torch
        module returns f32 logits, so this is contract-dependent).
    """
    B, S, H = hidden.shape
    V = lm_w.shape[1]
    BS = B * S

    assert bm % 8 == 0 and bv % 128 == 0, "bm must be 8-aligned, bv 128-aligned"
    bm = min(bm, _round_up(BS, 8))
    bv = min(bv, _round_up(V, 128))
    BSp = _round_up(BS, bm)
    Vp = _round_up(V, bv)
    nbs = BSp // bm
    nv = Vp // bv

    # ---- host-side layout plumbing (plain JAX, negligible) ----
    hidden2 = hidden.reshape(BS, H).astype(jnp.bfloat16)
    if BSp != BS:
        hidden2 = jnp.pad(hidden2, ((0, BSp - BS), (0, 0)))
    w = lm_w.astype(jnp.bfloat16)
    b = lm_b.reshape(1, V).astype(jnp.float32)
    if Vp != V:
        # zero weight columns + very negative bias: padded logits ~= -1e30,
        # exp underflows to 0 so the online logsumexp stays exact.
        w = jnp.pad(w, ((0, 0), (0, Vp - V)))
        b = jnp.pad(b, ((0, 0), (0, Vp - V)), constant_values=-1e30)

    # shifted labels: row (b, t) pairs logits at t with labels[b, t+1];
    # last position of each sequence marked -100 (replaces in-kernel S-1 slice)
    shifted = jnp.concatenate(
        [labels[:, 1:], jnp.full((B, 1), -100, labels.dtype)], axis=1
    ).reshape(BS, 1).astype(jnp.int32)

    # fold the loss weight host-side: quality * (1 + 0.5 * maritime)
    loss_w = (quality_scores.reshape(B, 1).astype(jnp.float32) *
              (1.0 + maritime_scores.reshape(B, 1).astype(jnp.float32) * 0.5))
    loss_w = jnp.broadcast_to(loss_w, (B, S)).reshape(BS, 1)
    if BSp != BS:
        shifted = jnp.pad(shifted, ((0, BSp - BS), (0, 0)), constant_values=-100)
        loss_w = jnp.pad(loss_w, ((0, BSp - BS), (0, 0)))

    # ---- VMEM budget: double-buffered tiles + scratch (+25% headroom) ----
    logit_isz = jnp.dtype(logits_dtype).itemsize
    if vmem_limit_bytes is None:
        est = (2 * (bm * H * 2            # hidden tile (bf16)
                    + H * bv * 2          # W tile (bf16)
                    + bv * 4              # bias tile
                    + 2 * bm * 128 * 4    # labels + weight (lane-padded)
                    + bm * bv * logit_isz  # logits tile
                    + 8 * 128 * 4)        # partials slab
               + 3 * bm * 128 * 4)        # scratch (lane-padded)
        vmem_limit_bytes = int(min(128 << 20,
                                   max(32 << 20, int(est * 1.25) + (4 << 20))))

    # optional deeper prefetch on lm_w (only large per-step input stream)
    if w_buffer_count > 2:
        w_spec = pl.BlockSpec((H, bv), lambda i, v: (0, v),
                              pipeline_mode=pl.Buffered(w_buffer_count))
    else:
        w_spec = pl.BlockSpec((H, bv), lambda i, v: (0, v))

    grid_spec = pltpu.PrefetchScalarGridSpec(
        num_scalar_prefetch=0,
        grid=(nbs, nv),
        in_specs=[
            pl.BlockSpec((bm, H), lambda i, v: (i, 0)),     # hidden (bf16)
            w_spec,                                          # lm_w   (bf16)
            pl.BlockSpec((1, bv), lambda i, v: (0, v)),      # lm_b   (f32)
            pl.BlockSpec((bm, 1), lambda i, v: (i, 0)),      # shifted labels
            pl.BlockSpec((bm, 1), lambda i, v: (i, 0)),      # folded loss weight
        ],
        out_specs=[
            pl.BlockSpec((bm, bv), lambda i, v: (i, v)),         # logits tile
            pl.BlockSpec((1, 8, 128), lambda i, v: (i, 0, 0)),   # partials
        ],
        scratch_shapes=[
            # TODO(synk): could merge into one (bm, 128) scratch to save the
            # lane padding on v7x; kept separate for clarity.
            pltpu.VMEM((bm, 1), jnp.float32),   # running max
            pltpu.VMEM((bm, 1), jnp.float32),   # running exp-sum
            pltpu.VMEM((bm, 1), jnp.float32),   # picked label logit
        ],
    )

    bs_sem = pltpu.CORE_PARALLEL if core_parallel else "parallel"

    logits2, parts = pl.pallas_call(
        _maritime_mlm_kernel,
        out_shape=(
            jax.ShapeDtypeStruct((BSp, Vp), logits_dtype),
            jax.ShapeDtypeStruct((nbs, 8, 128), jnp.float32),
        ),
        grid_spec=grid_spec,
        compiler_params=pltpu.CompilerParams(
            dimension_semantics=(bs_sem, "arbitrary"),
            vmem_limit_bytes=vmem_limit_bytes),
    )(hidden2, w, b, shifted, loss_w)

    logits = logits2[:BS, :V].reshape(B, S, V)
    wsum = jnp.sum(parts[:, 0, 0])
    cnt = jnp.sum(parts[:, 0, 1])
    # NOTE: torch reference produces NaN when every label is -100; we return 0.
    loss = wsum / jnp.maximum(cnt, 1.0)
    return logits, loss


def reference_forward(hidden, lm_w, lm_b, labels, quality_scores, maritime_scores):
    """Pure-JAX reference mirroring the PyTorch module's weighted-loss path
    (with matmul inputs rounded to bf16 to match the MXU path)."""
    B, S, H = hidden.shape
    h = hidden.astype(jnp.bfloat16).astype(jnp.float32).reshape(B * S, H)
    w = lm_w.astype(jnp.bfloat16).astype(jnp.float32)
    logits = h @ w + lm_b.reshape(1, -1)
    V = logits.shape[-1]
    logits = logits.reshape(B, S, V)
    shift_logits = logits[:, :-1, :]
    shift_labels = labels[:, 1:]
    valid = shift_labels != -100
    safe = jnp.where(valid, shift_labels, 0)
    logp = jax.nn.log_softmax(shift_logits, axis=-1)
    nll = -jnp.take_along_axis(logp, safe[..., None], axis=-1)[..., 0]
    weight_mask = valid.astype(jnp.float32)
    loss_weights = quality_scores * (1.0 + maritime_scores * 0.5)   # (B, 1)
    weighted = nll * weight_mask * loss_weights
    return logits, jnp.sum(weighted) / jnp.sum(weight_mask)


if __name__ == "__main__":
    # Small shapes consistent with the module's forward (MLM over token ids).
    # V=200 (not a multiple of 128) and B*S=18 (not a multiple of 8) exercise
    # the host-side padding path; bm=8 / bv=128 are TEST-ONLY tiles.
    B, S, H, V = 2, 9, 32, 200

    key = jax.random.PRNGKey(0)
    k_emb, k_w, k_b, k_ids, k_q, k_m = jax.random.split(key, 6)

    # Deterministic synthetic "base model" parameters.
    emb_table = jax.random.normal(k_emb, (V, H), jnp.float32) * 0.02
    lm_w = jax.random.normal(k_w, (H, V), jnp.float32) * 0.02
    lm_b = jax.random.normal(k_b, (1, V), jnp.float32) * 0.02

    # Inputs.
    input_ids = jax.random.randint(k_ids, (B, S), 0, V, dtype=jnp.int32)
    attention_mask = jnp.ones((B, S), jnp.float32)

    # MLM labels: -100 everywhere except a fixed set of masked positions.
    labels = jnp.full((B, S), -100, dtype=jnp.int32)
    labels = labels.at[:, 2].set(input_ids[:, 2])
    labels = labels.at[:, 5].set(input_ids[:, 5])

    quality_scores = jax.random.uniform(k_q, (B, 1), jnp.float32, 0.5, 1.0)
    maritime_scores = jax.random.uniform(k_m, (B, 1), jnp.float32, 0.0, 1.0)

    # Glue (plain JAX): embedding lookup + attention-mask zeroing stands in for
    # the DeBERTa encoder producing final hidden states.
    hidden = emb_table[input_ids] * attention_mask[..., None]

    logits, loss = maritime_mlm_forward(
        hidden, lm_w, lm_b, labels, quality_scores, maritime_scores,
        bm=8, bv=128)
    jax.block_until_ready((logits, loss))

    ref_logits, ref_loss = reference_forward(
        hidden, lm_w, lm_b, labels, quality_scores, maritime_scores)

    assert jnp.allclose(logits, ref_logits, atol=1e-4, rtol=1e-3), "logits mismatch"
    assert jnp.allclose(loss, ref_loss, atol=1e-4, rtol=1e-4), "loss mismatch"

    print("KERNEL_OK")
</pallas_src>

<mosaic_0001>
module attributes {stable_mosaic.version = 11 : i64} {
  func.func @_maritime_mlm_kernel(%arg0: i32, %arg1: i32, %arg2: memref<8x32xbf16, #tpu.memory_space<vmem>>, %arg3: memref<32x128xbf16, #tpu.memory_space<vmem>>, %arg4: memref<1x128xf32, #tpu.memory_space<vmem>>, %arg5: memref<8x1xi32, #tpu.memory_space<vmem>>, %arg6: memref<8x1xf32, #tpu.memory_space<vmem>>, %arg7: memref<8x128xf32, #tpu.memory_space<vmem>>, %arg8: memref<1x8x128xf32, #tpu.memory_space<vmem>>, %arg9: memref<8x1xf32, #tpu.memory_space<vmem>>, %arg10: memref<8x1xf32, #tpu.memory_space<vmem>>, %arg11: memref<8x1xf32, #tpu.memory_space<vmem>>) attributes {dimension_semantics = [#tpu.dimension_semantics<parallel>, #tpu.dimension_semantics<arbitrary>], iteration_bounds = array<i64: 3, 2>, scalar_prefetch = 0 : i64, scratch_operands = 3 : i64, tpu.core_type = #tpu.core_type<tc>, window_params = [{transform_indices = @transform_0, window_bounds = array<i64: 8, 32>}, {transform_indices = @transform_1, window_bounds = array<i64: 32, 128>}, {transform_indices = @transform_2, window_bounds = array<i64: 1, 128>}, {transform_indices = @transform_3, window_bounds = array<i64: 8, 1>}, {transform_indices = @transform_4, window_bounds = array<i64: 8, 1>}, {transform_indices = @transform_5, window_bounds = array<i64: 8, 128>}, {transform_indices = @transform_6, window_bounds = array<i64: 1, 8, 128>}]} {
    %c0_i32 = arith.constant 0 : i32
    %0 = arith.cmpi eq, %arg1, %c0_i32 : i32
    %1 = arith.extui %0 : i1 to i32
    %c0_i32_0 = arith.constant 0 : i32
    %2 = arith.cmpi ne, %1, %c0_i32_0 : i32
    scf.if %2 {
      %cst_29 = arith.constant 0xFF800000 : f32
      %44 = vector.broadcast %cst_29 : f32 to vector<8x1xf32>
      %c0_30 = arith.constant 0 : index
      %c0_31 = arith.constant 0 : index
      %45 = vector.load %arg9[%c0_30, %c0_31] : memref<8x1xf32, #tpu.memory_space<vmem>>, vector<8x1xf32>
      tpu.vector_store %arg9[%c0_30, %c0_31], %44 {strides = array<i32>} : memref<8x1xf32, #tpu.memory_space<vmem>>, vector<8x1xf32>,
      %cst_32 = arith.constant 0.000000e+00 : f32
      %46 = vector.broadcast %cst_32 : f32 to vector<8x1xf32>
      %c0_33 = arith.constant 0 : index
      %c0_34 = arith.constant 0 : index
      %47 = vector.load %arg10[%c0_33, %c0_34] : memref<8x1xf32, #tpu.memory_space<vmem>>, vector<8x1xf32>
      tpu.vector_store %arg10[%c0_33, %c0_34], %46 {strides = array<i32>} : memref<8x1xf32, #tpu.memory_space<vmem>>, vector<8x1xf32>,
      %cst_35 = arith.constant 0.000000e+00 : f32
      %48 = vector.broadcast %cst_35 : f32 to vector<8x1xf32>
      %c0_36 = arith.constant 0 : index
      %c0_37 = arith.constant 0 : index
      %49 = vector.load %arg11[%c0_36, %c0_37] : memref<8x1xf32, #tpu.memory_space<vmem>>, vector<8x1xf32>
      tpu.vector_store %arg11[%c0_36, %c0_37], %48 {strides = array<i32>} : memref<8x1xf32, #tpu.memory_space<vmem>>, vector<8x1xf32>,
    } else {
    }
    %c0 = arith.constant 0 : index
    %c0_1 = arith.constant 0 : index
    %3 = vector.load %arg2[%c0, %c0_1] : memref<8x32xbf16, #tpu.memory_space<vmem>>, vector<8x32xbf16>
    %c0_2 = arith.constant 0 : index
    %c0_3 = arith.constant 0 : index
    %4 = vector.load %arg3[%c0_2, %c0_3] : memref<32x128xbf16, #tpu.memory_space<vmem>>, vector<32x128xbf16>
    %cst = arith.constant dense<0.000000e+00> : vector<8x128xf32>
    %5 = tpu.matmul %3, %4, %cst {dimension_numbers = #tpu.dot_dimension_numbers<[1], [0], [0], [1], [0, 0, 1, 1], [], []>} : vector<8x32xbf16>, vector<32x128xbf16>, vector<8x128xf32> -> vector<8x128xf32>
    %c0_4 = arith.constant 0 : index
    %c0_5 = arith.constant 0 : index
    %6 = vector.load %arg4[%c0_4, %c0_5] : memref<1x128xf32, #tpu.memory_space<vmem>>, vector<1x128xf32>
    %7 = vector.broadcast %6 : vector<1x128xf32> to vector<8x128xf32>
    %8 = arith.addf %5, %7 : vector<8x128xf32>
    %c0_6 = arith.constant 0 : index
    %c0_7 = arith.constant 0 : index
    %9 = vector.load %arg7[%c0_6, %c0_7] : memref<8x128xf32, #tpu.memory_space<vmem>>, vector<8x128xf32>
    tpu.vector_store %arg7[%c0_6, %c0_7], %8 {strides = array<i32>} : memref<8x128xf32, #tpu.memory_space<vmem>>, vector<8x128xf32>,
    %cst_8 = arith.constant dense<0xFF800000> : vector<8xf32>
    %10 = vector.multi_reduction <maximumf>, %8, %cst_8 [1] : vector<8x128xf32> to vector<8xf32>
    %11 = vector.shape_cast %10 : vector<8xf32> to vector<8x1xf32>
    %c0_9 = arith.constant 0 : index
    %c0_10 = arith.constant 0 : index
    %12 = vector.load %arg9[%c0_9, %c0_10] : memref<8x1xf32, #tpu.memory_space<vmem>>, vector<8x1xf32>
    %13 = arith.maximumf %12, %11 : vector<8x1xf32>
    %c0_11 = arith.constant 0 : index
    %c0_12 = arith.constant 0 : index
    %14 = vector.load %arg9[%c0_11, %c0_12] : memref<8x1xf32, #tpu.memory_space<vmem>>, vector<8x1xf32>
    %15 = arith.subf %14, %13 : vector<8x1xf32>
    %16 = math.exp %15 : vector<8x1xf32>
    %c0_13 = arith.constant 0 : index
    %c0_14 = arith.constant 0 : index
    %17 = vector.load %arg10[%c0_13, %c0_14] : memref<8x1xf32, #tpu.memory_space<vmem>>, vector<8x1xf32>
    %18 = arith.mulf %16, %17 : vector<8x1xf32>
    %19 = vector.broadcast %13 : vector<8x1xf32> to vector<8x128xf32>
    %20 = arith.subf %8, %19 : vector<8x128xf32>
    %21 = math.exp %20 : vector<8x128xf32>
    %cst_15 = arith.constant dense<0.000000e+00> : vector<8xf32>
    %22 = vector.multi_reduction <add>, %21, %cst_15 [1] : vector<8x128xf32> to vector<8xf32>
    %23 = vector.shape_cast %22 : vector<8xf32> to vector<8x1xf32>
    %24 = arith.addf %18, %23 : vector<8x1xf32>
    %c0_16 = arith.constant 0 : index
    %c0_17 = arith.constant 0 : index
    %25 = vector.load %arg10[%c0_16, %c0_17] : memref<8x1xf32, #tpu.memory_space<vmem>>, vector<8x1xf32>
    tpu.vector_store %arg10[%c0_16, %c0_17], %24 {strides = array<i32>} : memref<8x1xf32, #tpu.memory_space<vmem>>, vector<8x1xf32>,
    %c0_18 = arith.constant 0 : index
    %c0_19 = arith.constant 0 : index
    %26 = vector.load %arg9[%c0_18, %c0_19] : memref<8x1xf32, #tpu.memory_space<vmem>>, vector<8x1xf32>
    tpu.vector_store %arg9[%c0_18, %c0_19], %13 {strides = array<i32>} : memref<8x1xf32, #tpu.memory_space<vmem>>, vector<8x1xf32>,
    %c0_20 = arith.constant 0 : index
    %c0_21 = arith.constant 0 : index
    %27 = vector.load %arg5[%c0_20, %c0_21] : memref<8x1xi32, #tpu.memory_space<vmem>>, vector<8x1xi32>
    %c128_i32 = arith.constant 128 : i32
    %28 = arith.muli %arg1, %c128_i32 : i32
    %29 = vector.broadcast %28 : i32 to vector<8x1xi32>
    %30 = arith.subi %27, %29 : vector<8x1xi32>
    %31 = tpu.iota {dimensions = array<i32: 1>} : vector<8x128xi32>
    %32 = vector.broadcast %30 : vector<8x1xi32> to vector<8x128xi32>
    %33 = arith.cmpi eq, %31, %32 : vector<8x128xi32>
    %c0_22 = arith.constant 0 : index
    %c0_23 = arith.constant 0 : index
    %34 = vector.load %arg11[%c0_22, %c0_23] : memref<8x1xf32, #tpu.memory_space<vmem>>, vector<8x1xf32>
    %cst_24 = arith.constant 0.000000e+00 : f32
    %35 = vector.broadcast %cst_24 : f32 to vector<8x128xf32>
    %36 = arith.select %33, %8, %35 : vector<8x128xi1>, vector<8x128xf32>
    %cst_25 = arith.constant dense<0.000000e+00> : vector<8xf32>
    %37 = vector.multi_reduction <add>, %36, %cst_25 [1] : vector<8x128xf32> to vector<8xf32>
    %38 = vector.shape_cast %37 : vector<8xf32> to vector<8x1xf32>
    %39 = arith.addf %34, %38 : vector<8x1xf32>
    %c0_26 = arith.constant 0 : index
    %c0_27 = arith.constant 0 : index
    %40 = vector.load %arg11[%c0_26, %c0_27] : memref<8x1xf32, #tpu.memory_space<vmem>>, vector<8x1xf32>
    tpu.vector_store %arg11[%c0_26, %c0_27], %39 {strides = array<i32>} : memref<8x1xf32, #tpu.memory_space<vmem>>, vector<8x1xf32>,
    %c1_i32 = arith.constant 1 : i32
    %41 = arith.cmpi eq, %arg1, %c1_i32 : i32
    %42 = arith.extui %41 : i1 to i32
    %c0_i32_28 = arith.constant 0 : i32
    %43 = arith.cmpi ne, %42, %c0_i32_28 : i32
    scf.if %43 {
      %c0_29 = arith.constant 0 : index
      %c0_30 = arith.constant 0 : index
      %44 = vector.load %arg9[%c0_29, %c0_30] : memref<8x1xf32, #tpu.memory_space<vmem>>, vector<8x1xf32>
      %c0_31 = arith.constant 0 : index
      %c0_32 = arith.constant 0 : index
      %45 = vector.load %arg10[%c0_31, %c0_32] : memref<8x1xf32, #tpu.memory_space<vmem>>, vector<8x1xf32>
      %46 = math.log %45 : vector<8x1xf32>
      %47 = arith.addf %44, %46 : vector<8x1xf32>
      %c0_33 = arith.constant 0 : index
      %c0_34 = arith.constant 0 : index
      %48 = vector.load %arg11[%c0_33, %c0_34] : memref<8x1xf32, #tpu.memory_space<vmem>>, vector<8x1xf32>
      %49 = arith.subf %47, %48 : vector<8x1xf32>
      %c0_35 = arith.constant 0 : index
      %c0_36 = arith.constant 0 : index
      %50 = vector.load %arg5[%c0_35, %c0_36] : memref<8x1xi32, #tpu.memory_space<vmem>>, vector<8x1xi32>
      %c-100_i32 = arith.constant -100 : i32
      %51 = vector.broadcast %c-100_i32 : i32 to vector<8x1xi32>
      %52 = arith.cmpi ne, %50, %51 : vector<8x1xi32>
      %53 = arith.extui %52 : vector<8x1xi1> to vector<8x1xi32>
      %54 = arith.sitofp %53 : vector<8x1xi32> to vector<8x1xf32>
      %55 = arith.mulf %49, %54 : vector<8x1xf32>
      %c0_37 = arith.constant 0 : index
      %c0_38 = arith.constant 0 : index
      %56 = vector.load %arg6[%c0_37, %c0_38] : memref<8x1xf32, #tpu.memory_space<vmem>>, vector<8x1xf32>
      %57 = arith.mulf %55, %56 : vector<8x1xf32>
      %58 = vector.shape_cast %57 : vector<8x1xf32> to vector<1x8x1xf32>
      %cst_39 = arith.constant dense<0.000000e+00> : vector<1xf32>
      %59 = vector.multi_reduction <add>, %58, %cst_39 [1, 2] : vector<1x8x1xf32> to vector<1xf32>
      %60 = vector.shape_cast %59 : vector<1xf32> to vector<1x1x1xf32>
      %61 = vector.extract %60[0, 0, 0] : f32 from vector<1x1x1xf32>
      %62 = vector.shape_cast %54 : vector<8x1xf32> to vector<1x8x1xf32>
      %cst_40 = arith.constant dense<0.000000e+00> : vector<1xf32>
      %63 = vector.multi_reduction <add>, %62, %cst_40 [1, 2] : vector<1x8x1xf32> to vector<1xf32>
      %64 = vector.shape_cast %63 : vector<1xf32> to vector<1x1x1xf32>
      %65 = vector.extract %64[0, 0, 0] : f32 from vector<1x1x1xf32>
      %66 = tpu.iota {dimensions = array<i32: 2>} : vector<1x8x128xi32>
      %c0_i32_41 = arith.constant 0 : i32
      %67 = vector.broadcast %c0_i32_41 : i32 to vector<1x8x128xi32>
      %68 = arith.cmpi eq, %66, %67 : vector<1x8x128xi32>
      %c1_i32_42 = arith.constant 1 : i32
      %69 = vector.broadcast %c1_i32_42 : i32 to vector<1x8x128xi32>
      %70 = arith.cmpi eq, %66, %69 : vector<1x8x128xi32>
      %cst_43 = arith.constant 0.000000e+00 : f32
      %71 = vector.broadcast %65 : f32 to vector<1x8x128xf32>
      %72 = vector.broadcast %cst_43 : f32 to vector<1x8x128xf32>
      %73 = arith.select %70, %71, %72 : vector<1x8x128xi1>, vector<1x8x128xf32>
      %74 = vector.broadcast %61 : f32 to vector<1x8x128xf32>
      %75 = arith.select %68, %74, %73 : vector<1x8x128xi1>, vector<1x8x128xf32>
      %c0_44 = arith.constant 0 : index
      %c0_45 = arith.constant 0 : index
      %c0_46 = arith.constant 0 : index
      %76 = vector.load %arg8[%c0_44, %c0_45, %c0_46] : memref<1x8x128xf32, #tpu.memory_space<vmem>>, vector<1x8x128xf32>
      tpu.vector_store %arg8[%c0_44, %c0_45, %c0_46], %75 {strides = array<i32>} : memref<1x8x128xf32, #tpu.memory_space<vmem>>, vector<1x8x128xf32>,
    } else {
    }
    return
  }
  func.func @transform_0(%arg0: i32, %arg1: i32) -> (i32, i32) {
    %c0_i32 = arith.constant 0 : i32
    %c0_i32_0 = arith.constant 0 : i32
    return %arg0, %c0_i32 : i32, i32
  }
  func.func @transform_1(%arg0: i32, %arg1: i32) -> (i32, i32) {
    %c0_i32 = arith.constant 0 : i32
    %c0_i32_0 = arith.constant 0 : i32
    return %c0_i32, %arg1 : i32, i32
  }
  func.func @transform_2(%arg0: i32, %arg1: i32) -> (i32, i32) {
    %c0_i32 = arith.constant 0 : i32
    %c0_i32_0 = arith.constant 0 : i32
    return %c0_i32, %arg1 : i32, i32
  }
  func.func @transform_3(%arg0: i32, %arg1: i32) -> (i32, i32) {
    %c0_i32 = arith.constant 0 : i32
    %c0_i32_0 = arith.constant 0 : i32
    return %arg0, %c0_i32 : i32, i32
  }
  func.func @transform_4(%arg0: i32, %arg1: i32) -> (i32, i32) {
    %c0_i32 = arith.constant 0 : i32
    %c0_i32_0 = arith.constant 0 : i32
    return %arg0, %c0_i32 : i32, i32
  }
  func.func @transform_5(%arg0: i32, %arg1: i32) -> (i32, i32) {
    %c0_i32 = arith.constant 0 : i32
    return %arg0, %arg1 : i32, i32
  }
  func.func @transform_6(%arg0: i32, %arg1: i32) -> (i32, i32, i32) {
    %c0_i32 = arith.constant 0 : i32
    %c0_i32_0 = arith.constant 0 : i32
    %c0_i32_1 = arith.constant 0 : i32
    return %arg0, %c0_i32, %c0_i32_0 : i32, i32, i32
  }
}

</mosaic_0001>

<llo_original>
// kernel: tpu_custom_call.1
$region0: #{tpu_custom_call.1}
  #allocation0 [shape = 'u32[]', space=smem, size = 0x4, offset = 0x4, fixed_abs, tag = 'smem constant byte address 0x4 - core index']
  #allocation1 [shape = 'u32[144,128]{1,0:T(1,128)}', space=vmem, size = 0x12000, scoped, tag = 'internal scratch']
  #allocation2 [shape = 'f32[8,1]{1,0:T(8,128)}', space=vmem, size = 0x1000, scoped, tag = 'scratch operand']
  #allocation3 [shape = 'f32[8,1]{1,0:T(8,128)}', space=vmem, size = 0x1000, scoped, tag = 'scratch operand']
  #allocation4 [shape = 'f32[8,1]{1,0:T(8,128)}', space=vmem, size = 0x1000, scoped, tag = 'scratch operand']
  %s0 = inlined_call_operand.vmem [shape: bf16[24,32], index: 0, kind: input, shape index: {}]
  %s1 = inlined_call_operand.vmem [shape: bf16[32,256], index: 1, kind: input, shape index: {}]
  %s2 = inlined_call_operand.vmem [shape: f32[1,256], index: 2, kind: input, shape index: {}]
  %s3 = inlined_call_operand.vmem [shape: s32[24,1], index: 3, kind: input, shape index: {}]
  %s4 = inlined_call_operand.vmem [shape: f32[24,1], index: 4, kind: input, shape index: {}]
  %s5 = inlined_call_operand.hbm [shape: f32[24,256], index: 5, kind: output, shape index: {0}]
  %s6 = inlined_call_operand.hbm [shape: f32[3,8,128], index: 6, kind: output, shape index: {1}]
  %7 = xla_tuple %s5, %s6
  %s8 = sld [smem:[#allocation0]]
  $region110: #{tpu_custom_call.1} parent=0
    _
  %s10 = ssub.s32 1, %s8
  %s11 = scalar_select 0, %s10, %s8
  $region1: #{tpu_custom_call.1} parent=0
    #allocation5 [shape = 'u8[16384]{0}', space=vmem, size = 0x4000, scoped, tag = 'input window, operand 1']
    #allocation6 [shape = 'u8[8192]{0}', space=vmem, size = 0x2000, scoped, tag = 'output window, operand 0']
    #allocation7 [shape = 's32[2]{0}', space=sflag, size = 0x8, scoped, tag = 'scoped memory for tpu_custom_call.1']
    #allocation8 [shape = 'u8[8192]{0}', space=vmem, size = 0x2000, scoped, tag = 'output window, operand 1']
    #allocation9 [shape = 's32[2]{0}', space=sflag, size = 0x8, scoped, tag = 'scoped memory for tpu_custom_call.1']
    %12 = vsyncpa [#allocation7], 0
    %s13 = scalar_lea.sflag [#allocation7], 1
    %14 = vsyncpa %s13, 0
    %15 = vsyncpa [#allocation9], 0
    %s16 = scalar_lea.sflag [#allocation9], 1
    %17 = vsyncpa %s16, 0
    loop: start=0, step=1, limit=8
    $region2: #{tpu_custom_call.1} parent=1 // loop_pre_header
      _
    $region3: #{tpu_custom_call.1} parent=1 // loop_header
      %s19 = sphi 0, %s23
      %p20 = scmp.ge.s32.totalorder %s19, 8
      %s26 = sphi 0, %s38
      %s27 = sphi 0, %s34
      %s28 = sphi 0, %s26
      %s29 = sphi 0, %s27
      %s30 = sphi 0, %s28
      %s31 = sphi 0, %s29
      %s41 = sphi 0, %s43
      %s44 = sphi 0, %s41
      %s45 = sphi 0, %s44
      %s61 = sphi 0, %s45
      %s67 = sphi 0, %s69
      %s70 = sphi 0, %s67
      %s71 = sphi 0, %s70
      %s87 = sphi 0, %s71
      %s93 = sphi 0, %s95
      %s96 = sphi 0, %s93
      %s97 = sphi 0, %s96
      %s113 = sphi 0, %s97
      %s119 = sphi 0, %s121
      %s122 = sphi 0, %s119
      %s123 = sphi 0, %s122
      %s139 = sphi 0, %s123
      %s145 = sphi 0, %s147
      %s148 = sphi 0, %s145
      %s149 = sphi 0, %s148
      %s165 = sphi 0, %s149
      %s173 = sphi 0, %s175
      %s176 = sphi 0, %s173
      %s177 = sphi 0, %s176
      %s193 = sphi 0, %s177
      %s199 = sphi 0, %s201
      %s202 = sphi 0, %s199
      %s203 = sphi 0, %s202
      %s219 = sphi 0, %s203
    $region4: #{tpu_custom_call.1} parent=1 // loop_header_branch
      %22 = sbr.rel (%p20) target = $region8
    $region5: #{tpu_custom_call.1} parent=1 // loop_body
      %s24 = ssub.s32 %s19, 1
      %s25 = ssub.s32 %s19, 2
      %s32 = sadd.s32 1, %s27
      %p33 = scmp.ge.s32.totalorder %s32, 2
      %s34 = scalar_select %p33, 0, %s32
      %s35 = sadd.s32 1, %s26
      %s36 = scalar_select %p33, %s35, %s26
      %p37 = scmp.ge.s32.totalorder %s36, 3
      %s38 = scalar_select %p37, 0, %s36
      %s39 = ssub.s32 %s26, %s38
      %p40 = scmp.eq.s32.totalorder %s39, 0
      %s42 = sadd.s32 %s41, 1
      %s43 = scalar_select %p40, %s41, %s42
      %p46 = pneg %p40
      %p47 = scmp.eq.s32.totalorder %s19, 5
      %p48 = por %p46, %p47
      %p49 = scmp.ne.s32.totalorder %s41, %s44
      %p50 = scmp.eq.s32.totalorder %s19, 0
      %p51 = por %p49, %p50
      %p52 = scmp.ne.s32.totalorder %s41, %s44
      %p53 = scmp.eq.s32.totalorder %s24, 5
      %p54 = por %p52, %p53
      %p55 = scmp.ne.s32.totalorder %s44, %s45
      %p56 = scmp.eq.s32.totalorder %s24, 0
      %p57 = por %p55, %p56
      %p58 = scmp.ne.s32.totalorder %s44, %s45
      %p59 = scmp.eq.s32.totalorder %s25, 5
      %p60 = por %p58, %p59
      %p62 = scmp.ne.s32.totalorder %s45, %s61
      %p63 = scmp.eq.s32.totalorder %s25, 0
      %p64 = por %p62, %p63
      %s65 = ssub.s32 %s27, %s34
      %p66 = scmp.eq.s32.totalorder %s65, 0
      %s68 = sadd.s32 %s67, 1
      %s69 = scalar_select %p66, %s67, %s68
      %p72 = pneg %p66
      %p73 = scmp.eq.s32.totalorder %s19, 5
      %p74 = por %p72, %p73
      %p75 = scmp.ne.s32.totalorder %s67, %s70
      %p76 = scmp.eq.s32.totalorder %s19, 0
      %p77 = por %p75, %p76
      %p78 = scmp.ne.s32.totalorder %s67, %s70
      %p79 = scmp.eq.s32.totalorder %s24, 5
      %p80 = por %p78, %p79
      %p81 = scmp.ne.s32.totalorder %s70, %s71
      %p82 = scmp.eq.s32.totalorder %s24, 0
      %p83 = por %p81, %p82
      %p84 = scmp.ne.s32.totalorder %s70, %s71
      %p85 = scmp.eq.s32.totalorder %s25, 5
      %p86 = por %p84, %p85
      %p88 = scmp.ne.s32.totalorder %s71, %s87
      %p89 = scmp.eq.s32.totalorder %s25, 0
      %p90 = por %p88, %p89
      %s91 = ssub.s32 %s27, %s34
      %p92 = scmp.eq.s32.totalorder %s91, 0
      %s94 = sadd.s32 %s93, 1
      %s95 = scalar_select %p92, %s93, %s94
      %p98 = pneg %p92
      %p99 = scmp.eq.s32.totalorder %s19, 5
      %p100 = por %p98, %p99
      %p101 = scmp.ne.s32.totalorder %s93, %s96
      %p102 = scmp.eq.s32.totalorder %s19, 0
      %p103 = por %p101, %p102
      %p104 = scmp.ne.s32.totalorder %s93, %s96
      %p105 = scmp.eq.s32.totalorder %s24, 5
      %p106 = por %p104, %p105
      %p107 = scmp.ne.s32.totalorder %s96, %s97
      %p108 = scmp.eq.s32.totalorder %s24, 0
      %p109 = por %p107, %p108
      %p110 = scmp.ne.s32.totalorder %s96, %s97
      %p111 = scmp.eq.s32.totalorder %s25, 5
      %p112 = por %p110, %p111
      %p114 = scmp.ne.s32.totalorder %s97, %s113
      %p115 = scmp.eq.s32.totalorder %s25, 0
      %p116 = por %p114, %p115
      %s117 = ssub.s32 %s26, %s38
      %p118 = scmp.eq.s32.totalorder %s117, 0
      %s120 = sadd.s32 %s119, 1
      %s121 = scalar_select %p118, %s119, %s120
      %p124 = pneg %p118
      %p125 = scmp.eq.s32.totalorder %s19, 5
      %p126 = por %p124, %p125
      %p127 = scmp.ne.s32.totalorder %s119, %s122
      %p128 = scmp.eq.s32.totalorder %s19, 0
      %p129 = por %p127, %p128
      %p130 = scmp.ne.s32.totalorder %s119, %s122
      %p131 = scmp.eq.s32.totalorder %s24, 5
      %p132 = por %p130, %p131
      %p133 = scmp.ne.s32.totalorder %s122, %s123
      %p134 = scmp.eq.s32.totalorder %s24, 0
      %p135 = por %p133, %p134
      %p136 = scmp.ne.s32.totalorder %s122, %s123
      %p137 = scmp.eq.s32.totalorder %s25, 5
      %p138 = por %p136, %p137
      %p140 = scmp.ne.s32.totalorder %s123, %s139
      %p141 = scmp.eq.s32.totalorder %s25, 0
      %p142 = por %p140, %p141
      %s143 = ssub.s32 %s26, %s38
      %p144 = scmp.eq.s32.totalorder %s143, 0
      %s146 = sadd.s32 %s145, 1
      %s147 = scalar_select %p144, %s145, %s146
      %p150 = pneg %p144
      %p151 = scmp.eq.s32.totalorder %s19, 5
      %p152 = por %p150, %p151
      %p153 = scmp.ne.s32.totalorder %s145, %s148
      %p154 = scmp.eq.s32.totalorder %s19, 0
      %p155 = por %p153, %p154
      %p156 = scmp.ne.s32.totalorder %s145, %s148
      %p157 = scmp.eq.s32.totalorder %s24, 5
      %p158 = por %p156, %p157
      %p159 = scmp.ne.s32.totalorder %s148, %s149
      %p160 = scmp.eq.s32.totalorder %s24, 0
      %p161 = por %p159, %p160
      %p162 = scmp.ne.s32.totalorder %s148, %s149
      %p163 = scmp.eq.s32.totalorder %s25, 5
      %p164 = por %p162, %p163
      %p166 = scmp.ne.s32.totalorder %s149, %s165
      %p167 = scmp.eq.s32.totalorder %s25, 0
      %p168 = por %p166, %p167
      %s169 = ssub.s32 %s26, %s38
      %s170 = ssub.s32 %s27, %s34
      %s171 = sor.u32 %s169, %s170
      %p172 = scmp.eq.s32.totalorder %s171, 0
      %s174 = sadd.s32 %s173, 1
      %s175 = scalar_select %p172, %s173, %s174
      %p178 = pneg %p172
      %p179 = scmp.eq.s32.totalorder %s19, 5
      %p180 = por %p178, %p179
      %p181 = scmp.ne.s32.totalorder %s173, %s176
      %p182 = scmp.eq.s32.totalorder %s19, 0
      %p183 = por %p181, %p182
      %p184 = scmp.ne.s32.totalorder %s173, %s176
      %p185 = scmp.eq.s32.totalorder %s24, 5
      %p186 = por %p184, %p185
      %p187 = scmp.ne.s32.totalorder %s176, %s177
      %p188 = scmp.eq.s32.totalorder %s24, 0
      %p189 = por %p187, %p188
      %p190 = scmp.ne.s32.totalorder %s176, %s177
      %p191 = scmp.eq.s32.totalorder %s25, 5
      %p192 = por %p190, %p191
      %p194 = scmp.ne.s32.totalorder %s177, %s193
      %p195 = scmp.eq.s32.totalorder %s25, 0
      %p196 = por %p194, %p195
      %s197 = ssub.s32 %s26, %s38
      %p198 = scmp.eq.s32.totalorder %s197, 0
      %s200 = sadd.s32 %s199, 1
      %s201 = scalar_select %p198, %s199, %s200
      %p204 = pneg %p198
      %p205 = scmp.eq.s32.totalorder %s19, 5
      %p206 = por %p204, %p205
      %p207 = scmp.ne.s32.totalorder %s199, %s202
      %p208 = scmp.eq.s32.totalorder %s19, 0
      %p209 = por %p207, %p208
      %p210 = scmp.ne.s32.totalorder %s199, %s202
      %p211 = scmp.eq.s32.totalorder %s24, 5
      %p212 = por %p210, %p211
      %p213 = scmp.ne.s32.totalorder %s202, %s203
      %p214 = scmp.eq.s32.totalorder %s24, 0
      %p215 = por %p213, %p214
      %p216 = scmp.ne.s32.totalorder %s202, %s203
      %p217 = scmp.eq.s32.totalorder %s25, 5
      %p218 = por %p216, %p217
      %p220 = scmp.ne.s32.totalorder %s203, %s219
      %p221 = scmp.eq.s32.totalorder %s25, 0
      %p222 = por %p220, %p221
      %p223 = scmp.le.s32.totalorder 1, %s19
      %p224 = scmp.lt.s32.totalorder %s19, 7
      %p225 = pnand %p223, %p224
      %p226 = pneg %p225
      // Predicated region
      $region9: #{tpu_custom_call.1} parent=5 // pred_check
        _
      $region10: #{tpu_custom_call.1} parent=5 // pred_check_branch
        %228 = sbr.rel (%p225) target = $region12
      $region11: #{tpu_custom_call.1} parent=5 // pred_region
        %s229 = ssub.s32 %s19, 1
      $region12: #{tpu_custom_call.1} parent=5 // pred_fallthru
        _
      %p230 = scmp.lt.s32.totalorder %s19, 6
      // Predicated region
      $region13: #{tpu_custom_call.1} parent=5 // pred_check
        %p231 = pneg %p230
      $region14: #{tpu_custom_call.1} parent=5 // pred_check_branch
        %233 = sbr.rel (%p231) target = $region16
      $region15: #{tpu_custom_call.1} parent=5 // pred_region
        // Predicated region
        $region17: #{tpu_custom_call.1} parent=15 // pred_check
          %p234 = pneg %p51
        $region18: #{tpu_custom_call.1} parent=15 // pred_check_branch
          %236 = sbr.rel (%p234) target = $region20
        $region19: #{tpu_custom_call.1} parent=15 // pred_region
          %p237 = scmp.lt.s32.totalorder %s26, 2
          %s238 = scalar_select %p237, %s26, 2
          %s239 = smul.addr %s238, 4
          %s240 = scalar_lea.vmem %s0, %s239
        $region20: #{tpu_custom_call.1} parent=15 // pred_fallthru
          _
        // Predicated region
        $region21: #{tpu_custom_call.1} parent=15 // pred_check
          %p241 = pneg %p77
        $region22: #{tpu_custom_call.1} parent=15 // pred_check_branch
          %243 = sbr.rel (%p241) target = $region24
        $region23: #{tpu_custom_call.1} parent=15 // pred_region
          %s244 = sand.u32 %s67, 1
          %s245 = sand.u32 %s67, 1
          %s246 = smul.addr %s245, 16
          %s247 = scalar_lea.vmem [#allocation5], %s246
          %s248 = smul.addr %s27, 4
          %s249 = scalar_lea.vmem %s1, %s248
          // Predicated region
          $region25: #{tpu_custom_call.1} parent=23 // pred_check
            _
          $region26: #{tpu_custom_call.1} parent=23 // pred_check_branch
            %251 = sbr.rel (0) target = $region28
          $region27: #{tpu_custom_call.1} parent=23 // pred_region
            // Predicated region
            $region29: #{tpu_custom_call.1} parent=27 // pred_check
              _
            $region30: #{tpu_custom_call.1} parent=27 // pred_check_branch
              %253 = sbr.rel target = $region32
            $region31: #{tpu_custom_call.1} parent=27 // pred_region
              // Predicated region
              $region44: #{tpu_custom_call.1} parent=31 // pred_check
                _
              $region45: #{tpu_custom_call.1} parent=31 // pred_check_branch
                %274 = sbr.rel (0) target = $region47
              $region46: #{tpu_custom_call.1} parent=31 // pred_region
                loop: start=0, step=1, limit=1
                $region48: #{tpu_custom_call.1} parent=46 // loop_pre_header
                  _
                $region49: #{tpu_custom_call.1} parent=46 // loop_header
                  %s276 = sphi 0, %s280
                  %p277 = scmp.ge.s32.totalorder %s276, 1
                  %s281 = sphi %s249, %s249
                  %s282 = sphi %s247, %s247
                $region50: #{tpu_custom_call.1} parent=46 // loop_header_branch
                  %279 = sbr.rel (%p277) target = $region54
                $region51: #{tpu_custom_call.1} parent=46 // loop_body
                  _
                $region52: #{tpu_custom_call.1} parent=46 // loop_footer
                  %s280 = sadd.s32 1, %s276
                $region53: #{tpu_custom_call.1} parent=46 // loop_footer_branch
                  %275 = sbr.rel target = $region49
                $region54: #{tpu_custom_call.1} parent=46 // loop_exit
                  _
                loop: start=0, step=1, limit=1
                $region55: #{tpu_custom_call.1} parent=46 // loop_pre_header
                  _
                $region56: #{tpu_custom_call.1} parent=46 // loop_header
                  %s285 = sphi 0, %s289
                  %p286 = scmp.ge.s32.totalorder %s285, 1
                  %s290 = sphi %s249, %s249
                  %s291 = sphi %s247, %s247
                $region57: #{tpu_custom_call.1} parent=46 // loop_header_branch
                  %288 = sbr.rel (%p286) target = $region61
                $region58: #{tpu_custom_call.1} parent=46 // loop_body
                  %v292 = vld [vmem:[%s290] sm:$0xf]
                  %293 = vst [vmem:[%s291] sm:$0xf] %v292
                  %v294 = vld [vmem:[%s290 + $0x8] sm:$0xf]
                  %295 = vst [vmem:[%s291 + $0x4] sm:$0xf] %v294
                  %v296 = vld [vmem:[%s290 + $0x10] sm:$0xf]
                  %297 = vst [vmem:[%s291 + $0x8] sm:$0xf] %v296
                  %v298 = vld [vmem:[%s290 + $0x18] sm:$0xf]
                  %299 = vst [vmem:[%s291 + $0xc] sm:$0xf] %v298
                $region59: #{tpu_custom_call.1} parent=46 // loop_footer
                  %s289 = sadd.s32 1, %s285
                $region60: #{tpu_custom_call.1} parent=46 // loop_footer_branch
                  %284 = sbr.rel target = $region56
                $region61: #{tpu_custom_call.1} parent=46 // loop_exit
                  _
              $region47: #{tpu_custom_call.1} parent=31 // pred_fallthru
                _
            $region32: #{tpu_custom_call.1} parent=27 // pred_fallthru
              _
            // Predicated region
            $region33: #{tpu_custom_call.1} parent=27 // pred_check
              _
            $region34: #{tpu_custom_call.1} parent=27 // pred_check_branch
              %255 = sbr.rel (0) target = $region36
            $region35: #{tpu_custom_call.1} parent=27 // pred_region
              loop: start=0, step=1, limit=1
              $region37: #{tpu_custom_call.1} parent=35 // loop_pre_header
                _
              $region38: #{tpu_custom_call.1} parent=35 // loop_header
                %s258 = sphi 0, %s262
                %p259 = scmp.ge.s32.totalorder %s258, 1
                %s263 = sphi %s249, %s249
                %s264 = sphi %s247, %s247
              $region39: #{tpu_custom_call.1} parent=35 // loop_header_branch
                %261 = sbr.rel (%p259) target = $region43
              $region40: #{tpu_custom_call.1} parent=35 // loop_body
                %v265 = vld [vmem:[%s263] sm:$0xf]
                %266 = vst [vmem:[%s264] sm:$0xf] %v265
                %v267 = vld [vmem:[%s263 + $0x8] sm:$0xf]
                %268 = vst [vmem:[%s264 + $0x4] sm:$0xf] %v267
                %v269 = vld [vmem:[%s263 + $0x10] sm:$0xf]
                %270 = vst [vmem:[%s264 + $0x8] sm:$0xf] %v269
                %v271 = vld [vmem:[%s263 + $0x18] sm:$0xf]
                %272 = vst [vmem:[%s264 + $0xc] sm:$0xf] %v271
              $region41: #{tpu_custom_call.1} parent=35 // loop_footer
                %s262 = sadd.s32 1, %s258
              $region42: #{tpu_custom_call.1} parent=35 // loop_footer_branch
                %257 = sbr.rel target = $region38
              $region43: #{tpu_custom_call.1} parent=35 // loop_exit
                _
            $region36: #{tpu_custom_call.1} parent=27 // pred_fallthru
              _
          $region28: #{tpu_custom_call.1} parent=23 // pred_fallthru
            _
          %300 = vnop
        $region24: #{tpu_custom_call.1} parent=15 // pred_fallthru
          _
        // Predicated region
        $region62: #{tpu_custom_call.1} parent=15 // pred_check
          %p301 = pneg %p103
        $region63: #{tpu_custom_call.1} parent=15 // pred_check_branch
          %303 = sbr.rel (%p301) target = $region65
        $region64: #{tpu_custom_call.1} parent=15 // pred_region
          %p304 = scmp.lt.s32.totalorder %s27, 1
          %s305 = scalar_select %p304, %s27, 1
          %s306 = scalar_lea.vmem %s2, %s305
        $region65: #{tpu_custom_call.1} parent=15 // pred_fallthru
          _
        // Predicated region
        $region66: #{tpu_custom_call.1} parent=15 // pred_check
          %p307 = pneg %p129
        $region67: #{tpu_custom_call.1} parent=15 // pred_check_branch
          %309 = sbr.rel (%p307) target = $region69
        $region68: #{tpu_custom_call.1} parent=15 // pred_region
          %p310 = scmp.lt.s32.totalorder %s26, 2
          %s311 = scalar_select %p310, %s26, 2
          %s312 = smul.addr %s311, 8
          %s313 = scalar_lea.vmem %s3, %s312
        $region69: #{tpu_custom_call.1} parent=15 // pred_fallthru
          _
        // Predicated region
        $region70: #{tpu_custom_call.1} parent=15 // pred_check
          %p314 = pneg %p155
        $region71: #{tpu_custom_call.1} parent=15 // pred_check_branch
          %316 = sbr.rel (%p314) target = $region73
        $region72: #{tpu_custom_call.1} parent=15 // pred_region
          %p317 = scmp.lt.s32.totalorder %s26, 2
          %s318 = scalar_select %p317, %s26, 2
          %s319 = smul.addr %s318, 8
          %s320 = scalar_lea.vmem %s4, %s319
        $region73: #{tpu_custom_call.1} parent=15 // pred_fallthru
          _
      $region16: #{tpu_custom_call.1} parent=5 // pred_fallthru
        _
      %p321 = scmp.le.s32.totalorder 1, %s19
      %p322 = scmp.lt.s32.totalorder %s19, 7
      %p323 = pnand %p321, %p322
      %p324 = pneg %p323
      // Predicated region
      $region74: #{tpu_custom_call.1} parent=5 // pred_check
        _
      $region75: #{tpu_custom_call.1} parent=5 // pred_check_branch
        %326 = sbr.rel (%p323) target = $region77
      $region76: #{tpu_custom_call.1} parent=5 // pred_region
        %s327 = ssub.s32 %s19, 1
        %s328 = sand.u32 %s70, 1
        %s329 = sand.u32 %s70, 1
        %s330 = smul.addr %s329, 16
        %s331 = scalar_lea.vmem [#allocation5], %s330
        // Predicated region
        $region78: #{tpu_custom_call.1} parent=76 // pred_check
          %p332 = pneg %p83
        $region79: #{tpu_custom_call.1} parent=76 // pred_check_branch
          %334 = sbr.rel (%p332) target = $region81
        $region80: #{tpu_custom_call.1} parent=76 // pred_region
          _
        $region81: #{tpu_custom_call.1} parent=76 // pred_fallthru
          _
        %p335 = scmp.lt.s32.totalorder %s28, 2
        %s336 = scalar_select %p335, %s28, 2
        %s337 = smul.addr %s336, 4
        %s338 = scalar_lea.vmem %s0, %s337
        %p339 = pneg %p57
        %p340 = pneg %p54
        %s341 = sand.u32 %s70, 1
        %s342 = sand.u32 %s70, 1
        %s343 = smul.addr %s342, 16
        %s344 = scalar_lea.vmem [#allocation5], %s343
        %p345 = pneg %p83
        %p346 = pneg %p80
        %p347 = scmp.lt.s32.totalorder %s29, 1
        %s348 = scalar_select %p347, %s29, 1
        %s349 = scalar_lea.vmem %s2, %s348
        %p350 = pneg %p109
        %p351 = pneg %p106
        %p352 = scmp.lt.s32.totalorder %s28, 2
        %s353 = scalar_select %p352, %s28, 2
        %s354 = smul.addr %s353, 8
        %s355 = scalar_lea.vmem %s3, %s354
        %p356 = pneg %p135
        %p357 = pneg %p132
        %p358 = scmp.lt.s32.totalorder %s28, 2
        %s359 = scalar_select %p358, %s28, 2
        %s360 = smul.addr %s359, 8
        %s361 = scalar_lea.vmem %s4, %s360
        %p362 = pneg %p161
        %p363 = pneg %p158
        %p364 = pneg %p189
        %p365 = pneg %p186
        %s366 = sand.u32 %s176, 1
        %s367 = scalar_lea.sflag [#allocation7], %s366
        %s368 = sand.u32 %s176, 1
        %s369 = smul.addr %s368, 8
        %s370 = scalar_lea.vmem [#allocation6], %s369
        %p371 = pneg %p215
        %p372 = pneg %p212
        %s373 = sand.u32 %s202, 1
        %s374 = scalar_lea.sflag [#allocation9], %s373
        %s375 = sand.u32 %s202, 1
        %s376 = smul.addr %s375, 8
        %s377 = scalar_lea.vmem [#allocation8], %s376
        %p378 = scmp.lt.s32.totalorder %s28, 2
        %s379 = scalar_select %p378, %s28, 2
        %s380 = smul.addr %s379, 4
        %s381 = scalar_lea.vmem %s0, %s380
        %p382 = scmp.lt.s32.totalorder %s29, 1
        %s383 = scalar_select %p382, %s29, 1
        %s384 = scalar_lea.vmem %s2, %s383
        %p385 = scmp.lt.s32.totalorder %s28, 2
        %s386 = scalar_select %p385, %s28, 2
        %s387 = smul.addr %s386, 8
        %s388 = scalar_lea.vmem %s3, %s387
        %p389 = scmp.lt.s32.totalorder %s28, 2
        %s390 = scalar_select %p389, %s28, 2
        %s391 = smul.addr %s390, 8
        %s392 = scalar_lea.vmem %s4, %s391
        %p394 = scmp.eq.s32.totalorder %s29, 0
        // Predicated region
        $region82: #{tpu_custom_call.1} parent=76 // pred_check
          %p395 = pneg %p394
        $region83: #{tpu_custom_call.1} parent=76 // pred_check_branch
          %397 = sbr.rel (%p395) target = $region85
        $region84: #{tpu_custom_call.1} parent=76 // pred_region
          %vm398 = vcmask 7168
          %399 = vst.msk [vmem:[#allocation2] sm:$0xff] %vm398, -inf
          %400 = vst.msk [vmem:[#allocation3] sm:$0xff] %vm398, 0.0
          %401 = vst.msk [vmem:[#allocation4] sm:$0xff] %vm398, 0.0
        $region85: #{tpu_custom_call.1} parent=76 // pred_fallthru
          _
        %v402 = vld [vmem:[%s381] sm:$0xf]
        %v403 = vld [vmem:[%s331] sm:$0xf]
        %v404 = vld [vmem:[%s331 + $0x4] sm:$0xf]
        %v405 = vld [vmem:[%s331 + $0x8] sm:$0xf]
        %v406 = vld [vmem:[%s331 + $0xc] sm:$0xf]
        %v407 = vld [vmem:[%s384] sm:$0x1]
        %v409 = vlaneseq
        %v410 = vshrl.u32 %v409, 7
        %v411 = vsub.s32 0, %v410
        %v412 = vrot.slane %v407, %v411
        %v418 = vunpack.c.l.b16 %v403
        %v419 = vunpack.c.l.b16 %v404
        %v420 = vunpack.c.l.b16 %v405
        %v421 = vunpack.c.l.b16 %v406
        %v422 = vpack.c.b16 %v419, %v418
        %v423 = vpack.c.b16 %v421, %v420
        %vm426 = vcmask 261120
        %v428 = vsel %vm426, %v402, 0
        %430 = vmatprep.subr.bf16.mxu0 0
        %431 = vmatpush1.bf16.msra.mxu0 %v422
        %432 = vmatprep.subr.bf16.mxu0 0
        %433 = vmatpush1.bf16.msra.mxu0 %v423
        %434 = vmatprep.subr.bf16.mxu0 0
        %435 = vmatpush1.bf16.msra.mxu0 0
        %436 = vmatprep.subr.bf16.mxu0 0
        %437 = vmatpush1.bf16.msra.mxu0 0
        %438 = vmatprep.subr.bf16.mxu0 0
        %439 = vmatpush1.bf16.msra.mxu0 0
        %440 = vmatprep.subr.bf16.mxu0 0
        %441 = vmatpush1.bf16.msra.mxu0 0
        %442 = vmatprep.subr.bf16.mxu0 0
        %443 = vmatpush1.bf16.msra.mxu0 0
        %444 = vmatprep.subr.bf16.mxu0 0
        %445 = vmatpush1.bf16.msra.mxu0 0
        %446 = vmatprep.subr.bf16.mxu0 0
        %447 = vmatpush1.bf16.msra.mxu0 0
        %448 = vmatprep.subr.bf16.mxu0 0
        %449 = vmatpush1.bf16.msra.mxu0 0
        %450 = vmatprep.subr.bf16.mxu0 0
        %451 = vmatpush1.bf16.msra.mxu0 0
        %452 = vmatprep.subr.bf16.mxu0 0
        %453 = vmatpush1.bf16.msra.mxu0 0
        %454 = vmatprep.subr.bf16.mxu0 0
        %455 = vmatpush1.bf16.msra.mxu0 0
        %456 = vmatprep.subr.bf16.mxu0 0
        %457 = vmatpush1.bf16.msra.mxu0 0
        %458 = vmatprep.subr.bf16.mxu0 0
        %459 = vmatpush1.bf16.msra.mxu0 0
        %460 = vmatprep.subr.bf16.mxu0 0
        %461 = vmatpush1.bf16.msra.mxu0 0
        %462 = vmatprep.mubr.bf16.mxu0 0
        %463 = vmatmul.mubr.bf16.gmra.mrb[0].mxu0 %v428
        %v464 = vpop.f32.mrb[0].mxu0
        %v465 = vadd.f32 %v412, %v464
        %v466 = vpop.f32.mrb[0].mxu0
        %v467 = vpop.f32.mrb[0].mxu0
        %v468 = vpop.f32.mrb[0].mxu0
        %469 = vdwg.mxu0
        %470 = vst [vmem:[%s370] sm:$0xff] %v465
        %471 = vmax.xlane.f32.xlu0 %v465
        %v472 = vpop.xlane.xlu0 %471
        %v473 = vld [vmem:[#allocation2] sm:$0xff]
        %v474 = vmax.f32 %v473, %v472
        %v475 = vsub.f32 %v473, %v474
        %v476 = vmul.f32 %v475, 1.442695
        %v477 = vpow.pop %v476
        %v478 = vld [vmem:[#allocation3] sm:$0xff]
        %v479 = vmul.f32 %v477, %v478
        %481 = vset.pattern.permute.xlu0 0
        %482 = vperm.xlu0 %481, %v474
        %v483 = vpop.permute.xlu0 %482
        %v485 = vsub.f32 %v465, %v483
        %v486 = vmul.f32 %v485, 1.442695
        %v487 = vpow.pop %v486
        %488 = vadd.xlane.f32.xlu0 %v487
        %v489 = vpop.xlane.xlu0 %488
        %v490 = vadd.f32 %v479, %v489
        %vm491 = vcmask 7168
        %492 = vst.msk [vmem:[#allocation3] sm:$0xff] %vm491, %v490
        %493 = vst.msk [vmem:[#allocation2] sm:$0xff] %vm491, %v474
        %v494 = vld [vmem:[%s388] sm:$0xff]
        %s495 = smul.u32 %s29, 128
        %v496 = vstv %s495
        %v497 = vsub.s32 %v494, %v496
        %v498 = vlaneseq
        %v499 = vand.u32 %v498, 127
        %500 = vset.pattern.permute.xlu0 0
        %501 = vperm.xlu0 %500, %v497
        %v502 = vpop.permute.xlu0 %501
        %vm503 = vcmp.eq.s32.totalorder %v499, %v502
        %v504 = vld [vmem:[#allocation4] sm:$0xff]
        %v505 = vsel %vm503, %v465, 0.0
        %506 = vadd.xlane.f32.xlu0 %v505
        %v507 = vpop.xlane.xlu0 %506
        %v508 = vadd.f32 %v504, %v507
        %509 = vst.msk [vmem:[#allocation4] sm:$0xff] %vm491, %v508
        %p510 = scmp.eq.s32.totalorder %s29, 1
        // Predicated region
        $region86: #{tpu_custom_call.1} parent=76 // pred_check
          %p511 = pneg %p510
        $region87: #{tpu_custom_call.1} parent=76 // pred_check_branch
          %513 = sbr.rel (%p511) target = $region89
        $region88: #{tpu_custom_call.1} parent=76 // pred_region
          %v514 = vld [vmem:[#allocation2] sm:$0xff]
          %v515 = vld [vmem:[#allocation3] sm:$0xff]
          %v516 = vlog2.pop %v515
          %v517 = vmul.f32 %v516, 0.6931472
          %v518 = vadd.f32 %v514, %v517
          %v519 = vld [vmem:[#allocation4] sm:$0xff]
          %v520 = vsub.f32 %v518, %v519
          %v521 = vld [vmem:[%s388] sm:$0xff]
          %vm522 = vcmp.ne.s32.totalorder %v521, 4294967196
          %v523 = vsel %vm522, 1, 0
          %v524 = vcvt.s32.f32 %v523
          %v525 = vmul.f32 %v520, %v524
          %v526 = vld [vmem:[%s392] sm:$0xff]
          %v527 = vmul.f32 %v525, %v526
          %v528 = vsel %vm491, %v527, 0.0
          %529 = vadd.xlane.f32.xlu0 %v528
          %v530 = vpop.xlane.xlu0 %529
          %v531 = vrot.slane %v530, 4
          %v532 = vadd.f32 %v530, %v531
          %v533 = vrot.slane %v532, 2
          %v534 = vadd.f32 %v532, %v533
          %v535 = vrot.slane %v534, 1
          %v536 = vadd.f32 %v534, %v535
          %s537 = vtos %v536
          %v538 = vsel %vm491, %v524, 0.0
          %539 = vadd.xlane.f32.xlu0 %v538
          %v540 = vpop.xlane.xlu0 %539
          %v541 = vrot.slane %v540, 4
          %v542 = vadd.f32 %v540, %v541
          %v543 = vrot.slane %v542, 2
          %v544 = vadd.f32 %v542, %v543
          %v545 = vrot.slane %v544, 1
          %v546 = vadd.f32 %v544, %v545
          %s547 = vtos %v546
          %vm548 = vcmp.eq.s32.totalorder %v499, 0
          %vm549 = vcmp.eq.s32.totalorder %v499, 1
          %v550 = vstv %s547
          %v551 = vsel %vm549, %v550, 0.0
          %v552 = vstv %s537
          %v553 = vsel %vm548, %v552, %v551
          %554 = vst [vmem:[%s377] sm:$0xff] %v553
        $region89: #{tpu_custom_call.1} parent=76 // pred_fallthru
          _
        %s555 = sand.u32 %s176, 1
        %s556 = scalar_lea.sflag [#allocation7], %s555
        %s557 = sand.u32 %s176, 1
        %s558 = smul.addr %s557, 8
        %s559 = scalar_lea.vmem [#allocation6], %s558
        %s560 = sand.u32 %s202, 1
        %s561 = scalar_lea.sflag [#allocation9], %s560
        %s562 = sand.u32 %s202, 1
        %s563 = smul.addr %s562, 8
        %s564 = scalar_lea.vmem [#allocation8], %s563
        // Predicated region
        $region90: #{tpu_custom_call.1} parent=76 // pred_check
          %p565 = pneg %p186
        $region91: #{tpu_custom_call.1} parent=76 // pred_check_branch
          %567 = sbr.rel (%p565) target = $region93
        $region92: #{tpu_custom_call.1} parent=76 // pred_region
          %s569 = ssub.s32 128, 128
          %570 = vsyncadd %s556, %s569
          %s571 = smul.addr %s28, 2
          %s572 = sadd.s32 %s29, %s571
          %s573 = smul.addr %s572, 128
          %s574 = scalar_lea.hbm %s5, %s573
          %s576 = sshll.u32 %s559, 4
          %s577 = int_to_ptr.vmem [resolvable:$true] %s576
          %579 = dma.vmem_to_hbm [thread:$0]  %s577, 128, %s574, %s556
        $region93: #{tpu_custom_call.1} parent=76 // pred_fallthru
          _
        // Predicated region
        $region94: #{tpu_custom_call.1} parent=76 // pred_check
          %p580 = pneg %p212
        $region95: #{tpu_custom_call.1} parent=76 // pred_check_branch
          %582 = sbr.rel (%p580) target = $region97
        $region96: #{tpu_custom_call.1} parent=76 // pred_region
          %s584 = ssub.s32 128, 128
          %585 = vsyncadd %s561, %s584
          %s586 = smul.addr %s28, 128
          %s587 = scalar_lea.hbm %s6, %s586
          %s589 = sshll.u32 %s564, 4
          %s590 = int_to_ptr.vmem [resolvable:$true] %s589
          %592 = dma.vmem_to_hbm [thread:$0]  %s590, 128, %s587, %s561
        $region97: #{tpu_custom_call.1} parent=76 // pred_fallthru
          _
      $region77: #{tpu_custom_call.1} parent=5 // pred_fallthru
        _
      %p593 = scmp.le.s32.totalorder 2, %s19
      // Predicated region
      $region98: #{tpu_custom_call.1} parent=5 // pred_check
        %p594 = pneg %p593
      $region99: #{tpu_custom_call.1} parent=5 // pred_check_branch
        %596 = sbr.rel (%p594) target = $region101
      $region100: #{tpu_custom_call.1} parent=5 // pred_region
        %s597 = ssub.s32 %s19, 2
        // Predicated region
        $region102: #{tpu_custom_call.1} parent=100 // pred_check
          %p598 = pneg %p192
        $region103: #{tpu_custom_call.1} parent=100 // pred_check_branch
          %600 = sbr.rel (%p598) target = $region105
        $region104: #{tpu_custom_call.1} parent=100 // pred_region
          %s601 = sand.u32 %s177, 1
          %s602 = scalar_lea.sflag [#allocation7], %s601
          %s603 = sand.u32 %s177, 1
          %s604 = smul.addr %s603, 8
          %s605 = scalar_lea.vmem [#allocation6], %s604
          %606 = dma.done %s602, 128
        $region105: #{tpu_custom_call.1} parent=100 // pred_fallthru
          _
        // Predicated region
        $region106: #{tpu_custom_call.1} parent=100 // pred_check
          %p607 = pneg %p218
        $region107: #{tpu_custom_call.1} parent=100 // pred_check_branch
          %609 = sbr.rel (%p607) target = $region109
        $region108: #{tpu_custom_call.1} parent=100 // pred_region
          %s610 = sand.u32 %s203, 1
          %s611 = scalar_lea.sflag [#allocation9], %s610
          %s612 = sand.u32 %s203, 1
          %s613 = smul.addr %s612, 8
          %s614 = scalar_lea.vmem [#allocation8], %s613
          %615 = dma.done %s611, 128
        $region109: #{tpu_custom_call.1} parent=100 // pred_fallthru
          _
      $region101: #{tpu_custom_call.1} parent=5 // pred_fallthru
        _
    $region6: #{tpu_custom_call.1} parent=1 // loop_footer
      %s23 = sadd.s32 1, %s19
    $region7: #{tpu_custom_call.1} parent=1 // loop_footer_branch
      %18 = sbr.rel target = $region3
    $region8: #{tpu_custom_call.1} parent=1 // loop_exit
      _
    %616 = vsyncpa [#allocation7], 1
    %s617 = scalar_lea.sflag [#allocation7], 1
    %618 = vsyncpa %s617, 1
    %619 = vsyncpa [#allocation9], 1
    %s620 = scalar_lea.sflag [#allocation9], 1
    %621 = vsyncpa %s620, 1

</llo_original>
